<compile_context>
chip_gen: v7x
topology: tpu7x:2x2x1
jax: 0.10.0
libtpu: 0.0.40
codegen_flags: <defaults>
</compile_context>

<pallas_src>
import jax
import jax.numpy as jnp
from jax.experimental import pallas as pl
from jax.experimental.pallas import tpu as pltpu


def _outconv_kernel(w_ref, b_ref, x_ref, o_ref):
    # w_ref: (Cout, Cin)      full 1x1-conv weight
    # b_ref: (Cout, 1)        bias (broadcast along lanes)
    # x_ref: (1, Cin, TS)     spatial tile of one batch element
    # o_ref: (1, Cout, TS)
    acc = jnp.dot(w_ref[...], x_ref[0], preferred_element_type=jnp.float32)
    o_ref[0] = (acc + b_ref[...]).astype(o_ref.dtype)


@jax.jit
def outconv_forward(x_nchw, weight, bias):
    """1x1 conv forward, matching nn.Conv2d(in_channels, out_channels, 1).

    x_nchw: (N, Cin, H, W)
    weight: (Cout, Cin, 1, 1)
    bias:   (Cout,)
    returns (N, Cout, H, W)
    """
    n, cin, h, w = x_nchw.shape
    cout = weight.shape[0]
    hw = h * w

    # Free (contiguous) reshapes -- no data movement in the wrapper.
    x3 = x_nchw.reshape(n, cin, hw)          # (N, Cin, HW)
    w_mat = weight.reshape(cout, cin)        # (Cout, Cin)
    b_mat = bias.reshape(cout, 1)            # (Cout, 1)

    # Spatial tile: full HW if small (block == full dim is always legal),
    # otherwise a large multiple of 128; Pallas handles the ragged tail.
    max_ts = 8192
    ts = hw if hw <= max_ts else max_ts

    grid = (n, pl.cdiv(hw, ts))

    # Explicit VMEM budget (double-buffered in/out tiles + weights + bias),
    # with headroom, capped well under v7x's 64 MiB physical VMEM.
    itemsize = x_nchw.dtype.itemsize
    step_bytes = (ts * cin + ts * cout) * itemsize + (cin * cout + cout) * 4
    vmem_limit = int(min(48 << 20, max(16 << 20, 4 * step_bytes + (4 << 20))))

    cost = pl.CostEstimate(
        flops=2 * n * hw * cin * cout,
        transcendentals=0,
        bytes_accessed=(n * cin * hw + n * cout * hw) * itemsize
        + (cout * cin + cout) * weight.dtype.itemsize,
    )

    out3 = pl.pallas_call(
        _outconv_kernel,
        out_shape=jax.ShapeDtypeStruct((n, cout, hw), x_nchw.dtype),
        grid_spec=pltpu.PrefetchScalarGridSpec(
            num_scalar_prefetch=0,
            grid=grid,
            in_specs=[
                pl.BlockSpec((cout, cin), lambda b, j: (0, 0)),
                pl.BlockSpec((cout, 1), lambda b, j: (0, 0)),
                pl.BlockSpec((1, cin, ts), lambda b, j: (b, 0, j)),
            ],
            out_specs=pl.BlockSpec((1, cout, ts), lambda b, j: (b, 0, j)),
        ),
        compiler_params=pltpu.CompilerParams(
            dimension_semantics=("parallel", "parallel"),
            vmem_limit_bytes=vmem_limit,
        ),
        cost_estimate=cost,
    )(w_mat, b_mat, x3)

    # Free (contiguous) reshape back to NCHW.
    return out3.reshape(n, cout, h, w)


if __name__ == "__main__":
    # Small synthetic config consistent with OutConv(in_channels, out_channels)
    batch, in_channels, out_channels, spatial = 2, 4, 3, 16

    key = jax.random.PRNGKey(0)
    kx, kw, kb = jax.random.split(key, 3)

    x = jax.random.normal(kx, (batch, in_channels, spatial, spatial),
                          dtype=jnp.float32)
    # Deterministic parameters (shapes match nn.Conv2d(Cin, Cout, kernel_size=1)).
    weight = jax.random.normal(kw, (out_channels, in_channels, 1, 1),
                               dtype=jnp.float32) * 0.1
    bias = jax.random.normal(kb, (out_channels,), dtype=jnp.float32) * 0.1

    out = outconv_forward(x, weight, bias)
    jax.block_until_ready(out)

    # Pure-JAX reference (same math as nn.Conv2d with kernel_size=1).
    ref = jnp.einsum("nchw,oc->nohw", x,
                     weight.reshape(out_channels, in_channels))
    ref = ref + bias[None, :, None, None]

    assert out.shape == (batch, out_channels, spatial, spatial)
    assert jnp.allclose(out, ref, atol=1e-5, rtol=1e-5)

    print("KERNEL_OK")
</pallas_src>

<mosaic_0001>
module attributes {stable_mosaic.version = 11 : i64} {
  func.func @_outconv_kernel(%arg0: i32, %arg1: i32, %arg2: memref<3x4xf32, #tpu.memory_space<vmem>>, %arg3: memref<3x1xf32, #tpu.memory_space<vmem>>, %arg4: memref<1x4x256xf32, #tpu.memory_space<vmem>>, %arg5: memref<1x3x256xf32, #tpu.memory_space<vmem>>) attributes {dimension_semantics = [#tpu.dimension_semantics<parallel>, #tpu.dimension_semantics<parallel>], iteration_bounds = array<i64: 2, 1>, scalar_prefetch = 0 : i64, scratch_operands = 0 : i64, tpu.core_type = #tpu.core_type<tc>, window_params = [{pipeline_mode = #tpu.pipeline_mode<synchronous>, transform_indices = @transform_0, window_bounds = array<i64: 3, 4>}, {pipeline_mode = #tpu.pipeline_mode<synchronous>, transform_indices = @transform_1, window_bounds = array<i64: 3, 1>}, {transform_indices = @transform_2, window_bounds = array<i64: 1, 4, 256>}, {transform_indices = @transform_3, window_bounds = array<i64: 1, 3, 256>}]} {
    %c0 = arith.constant 0 : index
    %c0_0 = arith.constant 0 : index
    %0 = vector.load %arg2[%c0, %c0_0] : memref<3x4xf32, #tpu.memory_space<vmem>>, vector<3x4xf32>
    %c0_1 = arith.constant 0 : index
    %c0_2 = arith.constant 0 : index
    %c0_3 = arith.constant 0 : index
    %1 = vector.load %arg4[%c0_1, %c0_2, %c0_3] : memref<1x4x256xf32, #tpu.memory_space<vmem>>, vector<1x4x256xf32>
    %2 = vector.shape_cast %1 : vector<1x4x256xf32> to vector<4x256xf32>
    %cst = arith.constant dense<0.000000e+00> : vector<3x256xf32>
    %3 = tpu.matmul %0, %2, %cst {dimension_numbers = #tpu.dot_dimension_numbers<[1], [0], [0], [1], [0, 0, 1, 1], [], []>} : vector<3x4xf32>, vector<4x256xf32>, vector<3x256xf32> -> vector<3x256xf32>
    %c0_4 = arith.constant 0 : index
    %c0_5 = arith.constant 0 : index
    %4 = vector.load %arg3[%c0_4, %c0_5] : memref<3x1xf32, #tpu.memory_space<vmem>>, vector<3x1xf32>
    %5 = vector.broadcast %4 : vector<3x1xf32> to vector<3x256xf32>
    %6 = arith.addf %3, %5 : vector<3x256xf32>
    %c0_6 = arith.constant 0 : index
    %c0_7 = arith.constant 0 : index
    %c0_8 = arith.constant 0 : index
    %7 = vector.load %arg5[%c0_6, %c0_7, %c0_8] : memref<1x3x256xf32, #tpu.memory_space<vmem>>, vector<1x3x256xf32>
    %8 = vector.shape_cast %7 : vector<1x3x256xf32> to vector<3x256xf32>
    %9 = vector.shape_cast %6 : vector<3x256xf32> to vector<1x3x256xf32>
    tpu.vector_store %arg5[%c0_6, %c0_7, %c0_8], %9 {strides = array<i32>} : memref<1x3x256xf32, #tpu.memory_space<vmem>>, vector<1x3x256xf32>,
    return
  }
  func.func @transform_0(%arg0: i32, %arg1: i32) -> (i32, i32) {
    %c0_i32 = arith.constant 0 : i32
    %c0_i32_0 = arith.constant 0 : i32
    %c0_i32_1 = arith.constant 0 : i32
    return %c0_i32, %c0_i32_0 : i32, i32
  }
  func.func @transform_1(%arg0: i32, %arg1: i32) -> (i32, i32) {
    %c0_i32 = arith.constant 0 : i32
    %c0_i32_0 = arith.constant 0 : i32
    %c0_i32_1 = arith.constant 0 : i32
    return %c0_i32, %c0_i32_0 : i32, i32
  }
  func.func @transform_2(%arg0: i32, %arg1: i32) -> (i32, i32, i32) {
    %c0_i32 = arith.constant 0 : i32
    %c0_i32_0 = arith.constant 0 : i32
    return %arg0, %c0_i32, %arg1 : i32, i32, i32
  }
  func.func @transform_3(%arg0: i32, %arg1: i32) -> (i32, i32, i32) {
    %c0_i32 = arith.constant 0 : i32
    %c0_i32_0 = arith.constant 0 : i32
    return %arg0, %c0_i32, %arg1 : i32, i32, i32
  }
}

</mosaic_0001>

<llo_original>
// kernel: outconv_forward.1
$region0: #{outconv_forward.1}
  #allocation0 [shape = 'u32[]', space=smem, size = 0x4, offset = 0x4, fixed_abs, tag = 'smem constant byte address 0x4 - core index']
  #allocation1 [shape = 'u32[144,128]{1,0:T(1,128)}', space=vmem, size = 0x12000, scoped, tag = 'internal scratch']
  %s0 = inlined_call_operand.vmem [shape: f32[3,4], index: 0, kind: input, shape index: {}]
  %s1 = inlined_call_operand.vmem [shape: f32[3,1], index: 1, kind: input, shape index: {}]
  %s2 = inlined_call_operand.vmem [shape: f32[2,4,256], index: 2, kind: input, shape index: {}]
  %s3 = inlined_call_operand.vmem [shape: f32[2,3,256], index: 3, kind: output, shape index: {}]
  %s4 = sld [smem:[#allocation0]]
  $region45: #{outconv_forward.1} parent=0
    _
  %s6 = ssub.s32 1, %s4
  %s7 = scalar_select 0, %s6, %s4
  loop: start=0, step=1, limit=4
  $region2: #{outconv_forward.1} parent=0 // loop_pre_header
    _
  $region3: #{outconv_forward.1} parent=0 // loop_header
    %s9 = sphi 0, %s13
    %p10 = scmp.ge.s32.totalorder %s9, 4
    %s16 = sphi 0, %s28
    %s17 = sphi 0, %s24
    %s18 = sphi 0, %s16
    %s19 = sphi 0, %s17
    %s20 = sphi 0, %s18
    %s21 = sphi 0, %s19
    %s29 = sphi 0, %s29
    %s31 = sphi 0, %s29
    %s32 = sphi 0, %s31
    %s46 = sphi 0, %s32
    %s50 = sphi 0, %s50
    %s52 = sphi 0, %s50
    %s53 = sphi 0, %s52
    %s67 = sphi 0, %s53
    %s75 = sphi 0, %s77
    %s78 = sphi 0, %s75
    %s79 = sphi 0, %s78
    %s95 = sphi 0, %s79
    %s103 = sphi 0, %s105
    %s106 = sphi 0, %s103
    %s107 = sphi 0, %s106
    %s123 = sphi 0, %s107
  $region4: #{outconv_forward.1} parent=0 // loop_header_branch
    %12 = sbr.rel (%p10) target = $region8
  $region5: #{outconv_forward.1} parent=0 // loop_body
    %s14 = ssub.s32 %s9, 1
    %s15 = ssub.s32 %s9, 2
    %s22 = sadd.s32 1, %s17
    %p23 = scmp.ge.s32.totalorder %s22, 1
    %s24 = scalar_select %p23, 0, %s22
    %s25 = sadd.s32 1, %s16
    %s26 = scalar_select %p23, %s25, %s16
    %p27 = scmp.ge.s32.totalorder %s26, 2
    %s28 = scalar_select %p27, 0, %s26
    %s30 = sadd.s32 %s29, 1
    %p33 = scmp.eq.s32.totalorder %s9, 1
    %p34 = scmp.ne.s32.totalorder %s29, %s31
    %p35 = scmp.eq.s32.totalorder %s9, 0
    %p36 = por %p34, %p35
    %p37 = scmp.ne.s32.totalorder %s29, %s31
    %p38 = scmp.eq.s32.totalorder %s14, 1
    %p39 = por %p37, %p38
    %p40 = scmp.ne.s32.totalorder %s31, %s32
    %p41 = scmp.eq.s32.totalorder %s14, 0
    %p42 = por %p40, %p41
    %p43 = scmp.ne.s32.totalorder %s31, %s32
    %p44 = scmp.eq.s32.totalorder %s15, 1
    %p45 = por %p43, %p44
    %p47 = scmp.ne.s32.totalorder %s32, %s46
    %p48 = scmp.eq.s32.totalorder %s15, 0
    %p49 = por %p47, %p48
    %s51 = sadd.s32 %s50, 1
    %p54 = scmp.eq.s32.totalorder %s9, 1
    %p55 = scmp.ne.s32.totalorder %s50, %s52
    %p56 = scmp.eq.s32.totalorder %s9, 0
    %p57 = por %p55, %p56
    %p58 = scmp.ne.s32.totalorder %s50, %s52
    %p59 = scmp.eq.s32.totalorder %s14, 1
    %p60 = por %p58, %p59
    %p61 = scmp.ne.s32.totalorder %s52, %s53
    %p62 = scmp.eq.s32.totalorder %s14, 0
    %p63 = por %p61, %p62
    %p64 = scmp.ne.s32.totalorder %s52, %s53
    %p65 = scmp.eq.s32.totalorder %s15, 1
    %p66 = por %p64, %p65
    %p68 = scmp.ne.s32.totalorder %s53, %s67
    %p69 = scmp.eq.s32.totalorder %s15, 0
    %p70 = por %p68, %p69
    %s71 = ssub.s32 %s16, %s28
    %s72 = ssub.s32 %s17, %s24
    %s73 = sor.u32 %s71, %s72
    %p74 = scmp.eq.s32.totalorder %s73, 0
    %s76 = sadd.s32 %s75, 1
    %s77 = scalar_select %p74, %s75, %s76
    %p80 = pneg %p74
    %p81 = scmp.eq.s32.totalorder %s9, 1
    %p82 = por %p80, %p81
    %p83 = scmp.ne.s32.totalorder %s75, %s78
    %p84 = scmp.eq.s32.totalorder %s9, 0
    %p85 = por %p83, %p84
    %p86 = scmp.ne.s32.totalorder %s75, %s78
    %p87 = scmp.eq.s32.totalorder %s14, 1
    %p88 = por %p86, %p87
    %p89 = scmp.ne.s32.totalorder %s78, %s79
    %p90 = scmp.eq.s32.totalorder %s14, 0
    %p91 = por %p89, %p90
    %p92 = scmp.ne.s32.totalorder %s78, %s79
    %p93 = scmp.eq.s32.totalorder %s15, 1
    %p94 = por %p92, %p93
    %p96 = scmp.ne.s32.totalorder %s79, %s95
    %p97 = scmp.eq.s32.totalorder %s15, 0
    %p98 = por %p96, %p97
    %s99 = ssub.s32 %s16, %s28
    %s100 = ssub.s32 %s17, %s24
    %s101 = sor.u32 %s99, %s100
    %p102 = scmp.eq.s32.totalorder %s101, 0
    %s104 = sadd.s32 %s103, 1
    %s105 = scalar_select %p102, %s103, %s104
    %p108 = pneg %p102
    %p109 = scmp.eq.s32.totalorder %s9, 1
    %p110 = por %p108, %p109
    %p111 = scmp.ne.s32.totalorder %s103, %s106
    %p112 = scmp.eq.s32.totalorder %s9, 0
    %p113 = por %p111, %p112
    %p114 = scmp.ne.s32.totalorder %s103, %s106
    %p115 = scmp.eq.s32.totalorder %s14, 1
    %p116 = por %p114, %p115
    %p117 = scmp.ne.s32.totalorder %s106, %s107
    %p118 = scmp.eq.s32.totalorder %s14, 0
    %p119 = por %p117, %p118
    %p120 = scmp.ne.s32.totalorder %s106, %s107
    %p121 = scmp.eq.s32.totalorder %s15, 1
    %p122 = por %p120, %p121
    %p124 = scmp.ne.s32.totalorder %s107, %s123
    %p125 = scmp.eq.s32.totalorder %s15, 0
    %p126 = por %p124, %p125
    %p127 = scmp.le.s32.totalorder 1, %s9
    %p128 = scmp.lt.s32.totalorder %s9, 3
    %p129 = pnand %p127, %p128
    %p130 = pneg %p129
    // Predicated region
    $region9: #{outconv_forward.1} parent=5 // pred_check
      _
    $region10: #{outconv_forward.1} parent=5 // pred_check_branch
      %132 = sbr.rel (%p129) target = $region12
    $region11: #{outconv_forward.1} parent=5 // pred_region
      %s133 = ssub.s32 %s9, 1
      // Predicated region
      $region13: #{outconv_forward.1} parent=11 // pred_check
        %p134 = pneg %p42
      $region14: #{outconv_forward.1} parent=11 // pred_check_branch
        %136 = sbr.rel (%p134) target = $region16
      $region15: #{outconv_forward.1} parent=11 // pred_region
        _
      $region16: #{outconv_forward.1} parent=11 // pred_fallthru
        _
      // Predicated region
      $region17: #{outconv_forward.1} parent=11 // pred_check
        %p137 = pneg %p63
      $region18: #{outconv_forward.1} parent=11 // pred_check_branch
        %139 = sbr.rel (%p137) target = $region20
      $region19: #{outconv_forward.1} parent=11 // pred_region
        _
      $region20: #{outconv_forward.1} parent=11 // pred_fallthru
        _
    $region12: #{outconv_forward.1} parent=5 // pred_fallthru
      _
    %p140 = scmp.lt.s32.totalorder %s9, 2
    // Predicated region
    $region21: #{outconv_forward.1} parent=5 // pred_check
      %p141 = pneg %p140
    $region22: #{outconv_forward.1} parent=5 // pred_check_branch
      %143 = sbr.rel (%p141) target = $region24
    $region23: #{outconv_forward.1} parent=5 // pred_region
      // Predicated region
      $region25: #{outconv_forward.1} parent=23 // pred_check
        %p144 = pneg %p85
      $region26: #{outconv_forward.1} parent=23 // pred_check_branch
        %146 = sbr.rel (%p144) target = $region28
      $region27: #{outconv_forward.1} parent=23 // pred_region
        %s147 = smul.u32 2, %s17
        %p148 = scmp.lt.s32.totalorder %s16, 1
        %s149 = scalar_select %p148, %s16, 1
        %p150 = scmp.lt.s32.totalorder %s147, 1
        %s151 = scalar_select %p150, %s147, 1
        %s152 = smul.addr %s149, 2
        %s153 = sadd.s32 %s151, %s152
        %s154 = smul.addr %s153, 4
        %s155 = scalar_lea.vmem %s2, %s154
        %s156 = smul.u32 2, %s17
      $region28: #{outconv_forward.1} parent=23 // pred_fallthru
        _
    $region24: #{outconv_forward.1} parent=5 // pred_fallthru
      _
    %p157 = scmp.le.s32.totalorder 1, %s9
    %p158 = scmp.lt.s32.totalorder %s9, 3
    %p159 = pnand %p157, %p158
    %p160 = pneg %p159
    // Predicated region
    $region29: #{outconv_forward.1} parent=5 // pred_check
      _
    $region30: #{outconv_forward.1} parent=5 // pred_check_branch
      %162 = sbr.rel (%p159) target = $region32
    $region31: #{outconv_forward.1} parent=5 // pred_region
      %s163 = ssub.s32 %s9, 1
      %p164 = pneg %p42
      %p165 = pneg %p39
      %p166 = pneg %p63
      %p167 = pneg %p60
      %s168 = smul.u32 2, %s19
      %p169 = scmp.lt.s32.totalorder %s18, 1
      %s170 = scalar_select %p169, %s18, 1
      %p171 = scmp.lt.s32.totalorder %s168, 1
      %s172 = scalar_select %p171, %s168, 1
      %s173 = smul.addr %s170, 2
      %s174 = sadd.s32 %s172, %s173
      %s175 = smul.addr %s174, 4
      %s176 = scalar_lea.vmem %s2, %s175
      %p177 = pneg %p91
      %p178 = pneg %p88
      %p179 = pneg %p119
      %p180 = pneg %p116
      %s181 = smul.u32 2, %s19
      %p182 = scmp.lt.s32.totalorder %s18, 1
      %s183 = scalar_select %p182, %s18, 1
      %p184 = scmp.lt.s32.totalorder %s181, 1
      %s185 = scalar_select %p184, %s181, 1
      %s186 = smul.addr %s183, 2
      %s187 = sadd.s32 %s185, %s186
      %s188 = smul.addr %s187, 4
      %s189 = scalar_lea.vmem %s3, %s188
      %s190 = smul.u32 2, %s19
      %p191 = scmp.lt.s32.totalorder %s18, 1
      %s192 = scalar_select %p191, %s18, 1
      %p193 = scmp.lt.s32.totalorder %s190, 1
      %s194 = scalar_select %p193, %s190, 1
      %s195 = smul.addr %s192, 2
      %s196 = sadd.s32 %s194, %s195
      %s197 = smul.addr %s196, 4
      %s198 = scalar_lea.vmem %s2, %s197
      %s199 = smul.u32 2, %s19
      %s200 = smul.u32 2, %s19
      %p201 = scmp.lt.s32.totalorder %s18, 1
      %s202 = scalar_select %p201, %s18, 1
      %p203 = scmp.lt.s32.totalorder %s200, 1
      %s204 = scalar_select %p203, %s200, 1
      %s205 = smul.addr %s202, 2
      %s206 = sadd.s32 %s204, %s205
      %s207 = smul.addr %s206, 4
      %s208 = scalar_lea.vmem %s3, %s207
      %s209 = smul.u32 2, %s19
      %v210 = vld [vmem:[%s0] sm:$0x7]
      %v211 = vld [vmem:[%s198] sm:$0xff]
      %v212 = vld [vmem:[%s1] sm:$0x7]
      %214 = vset.pattern.permute.xlu0 0
      %215 = vperm.xlu0 %214, %v212
      %v216 = vpop.permute.xlu0 %215
      %v219 = vcombine.high %v211, %v211
      %vm220 = vcmask 31744
      %v222 = vsel %vm220, %v210, 0
      %vm224 = vcmask 1043456
      %v225 = vsel %vm224, %v211, 0
      %v227 = vsel %vm224, %v219, 0
      %229 = vmatprep.subr.mxu0 %v227
      %230 = vmatpush1.msra.mxu0 %v225
      %231 = vmatprep.subr.mxu0 0.0
      %232 = vmatpush1.msra.mxu0 0.0
      %233 = vmatprep.subr.mxu0 0.0
      %234 = vmatpush1.msra.mxu0 0.0
      %235 = vmatprep.subr.mxu0 0.0
      %236 = vmatpush1.msra.mxu0 0.0
      %237 = vmatprep.subr.mxu0 0.0
      %238 = vmatpush1.msra.mxu0 0.0
      %239 = vmatprep.subr.mxu0 0.0
      %240 = vmatpush1.msra.mxu0 0.0
      %241 = vmatprep.subr.mxu0 0.0
      %242 = vmatpush1.msra.mxu0 0.0
      %243 = vmatprep.subr.mxu0 0.0
      %244 = vmatpush1.msra.mxu0 0.0
      %245 = vmatprep.subr.mxu0 0.0
      %246 = vmatpush1.msra.mxu0 0.0
      %247 = vmatprep.subr.mxu0 0.0
      %248 = vmatpush1.msra.mxu0 0.0
      %249 = vmatprep.subr.mxu0 0.0
      %250 = vmatpush1.msra.mxu0 0.0
      %251 = vmatprep.subr.mxu0 0.0
      %252 = vmatpush1.msra.mxu0 0.0
      %253 = vmatprep.subr.mxu0 0.0
      %254 = vmatpush1.msra.mxu0 0.0
      %255 = vmatprep.subr.mxu0 0.0
      %256 = vmatpush1.msra.mxu0 0.0
      %257 = vmatprep.subr.mxu0 0.0
      %258 = vmatpush1.msra.mxu0 0.0
      %259 = vmatprep.subr.mxu0 0.0
      %260 = vmatpush1.msra.mxu0 0.0
      %261 = vmatprep.subr.mxu0 0.0
      %262 = vmatpush1.msra.mxu0 0.0
      %263 = vmatprep.subr.mxu0 0.0
      %264 = vmatpush1.msra.mxu0 0.0
      %265 = vmatprep.subr.mxu0 0.0
      %266 = vmatpush1.msra.mxu0 0.0
      %267 = vmatprep.subr.mxu0 0.0
      %268 = vmatpush1.msra.mxu0 0.0
      %269 = vmatprep.subr.mxu0 0.0
      %270 = vmatpush1.msra.mxu0 0.0
      %271 = vmatprep.subr.mxu0 0.0
      %272 = vmatpush1.msra.mxu0 0.0
      %273 = vmatprep.subr.mxu0 0.0
      %274 = vmatpush1.msra.mxu0 0.0
      %275 = vmatprep.subr.mxu0 0.0
      %276 = vmatpush1.msra.mxu0 0.0
      %277 = vmatprep.subr.mxu0 0.0
      %278 = vmatpush1.msra.mxu0 0.0
      %279 = vmatprep.subr.mxu0 0.0
      %280 = vmatpush1.msra.mxu0 0.0
      %281 = vmatprep.subr.mxu0 0.0
      %282 = vmatpush1.msra.mxu0 0.0
      %283 = vmatprep.subr.mxu0 0.0
      %284 = vmatpush1.msra.mxu0 0.0
      %285 = vmatprep.subr.mxu0 0.0
      %286 = vmatpush1.msra.mxu0 0.0
      %287 = vmatprep.subr.mxu0 0.0
      %288 = vmatpush1.msra.mxu0 0.0
      %289 = vmatprep.subr.mxu0 0.0
      %290 = vmatpush1.msra.mxu0 0.0
      %291 = vmatprep.subr.mxu0 0.0
      %292 = vmatpush1.msra.mxu0 0.0
      %293 = vmatprep.mubr.f32.mxu0 0.0
      %294 = vmatmul.mubr.f32.gmra.mrb[0].mxu0 %v222
      %v295 = vpop.f32.mrb[0].mxu0
      %v296 = vadd.f32 %v216, %v295
      %v297 = vpop.f32.mrb[0].mxu0
      %v298 = vadd.f32 %v216, %v297
      %299 = vdwg.mxu0
      %v302 = vcombine.low %v296, %v298
      %304 = vst [vmem:[%s208] sm:$0x77] %v302
      %s305 = smul.u32 2, %s19
      %p306 = scmp.lt.s32.totalorder %s18, 1
      %s307 = scalar_select %p306, %s18, 1
      %p308 = scmp.lt.s32.totalorder %s305, 1
      %s309 = scalar_select %p308, %s305, 1
      %s310 = smul.addr %s307, 2
      %s311 = sadd.s32 %s309, %s310
      %s312 = smul.addr %s311, 4
      %s313 = scalar_lea.vmem %s3, %s312
      // Predicated region
      $region33: #{outconv_forward.1} parent=31 // pred_check
        %p314 = pneg %p116
      $region34: #{outconv_forward.1} parent=31 // pred_check_branch
        %316 = sbr.rel (%p314) target = $region36
      $region35: #{outconv_forward.1} parent=31 // pred_region
        %s317 = smul.u32 2, %s19
      $region36: #{outconv_forward.1} parent=31 // pred_fallthru
        _
    $region32: #{outconv_forward.1} parent=5 // pred_fallthru
      _
    %p318 = scmp.le.s32.totalorder 2, %s9
    // Predicated region
    $region37: #{outconv_forward.1} parent=5 // pred_check
      %p319 = pneg %p318
    $region38: #{outconv_forward.1} parent=5 // pred_check_branch
      %321 = sbr.rel (%p319) target = $region40
    $region39: #{outconv_forward.1} parent=5 // pred_region
      %s322 = ssub.s32 %s9, 2
      // Predicated region
      $region41: #{outconv_forward.1} parent=39 // pred_check
        %p323 = pneg %p122
      $region42: #{outconv_forward.1} parent=39 // pred_check_branch
        %325 = sbr.rel (%p323) target = $region44
      $region43: #{outconv_forward.1} parent=39 // pred_region
        %s326 = smul.u32 2, %s21
        %p327 = scmp.lt.s32.totalorder %s20, 1
        %s328 = scalar_select %p327, %s20, 1
        %p329 = scmp.lt.s32.totalorder %s326, 1
        %s330 = scalar_select %p329, %s326, 1
        %s331 = smul.addr %s328, 2
        %s332 = sadd.s32 %s330, %s331
        %s333 = smul.addr %s332, 4
        %s334 = scalar_lea.vmem %s3, %s333
      $region44: #{outconv_forward.1} parent=39 // pred_fallthru
        _
    $region40: #{outconv_forward.1} parent=5 // pred_fallthru
      _
  $region6: #{outconv_forward.1} parent=0 // loop_footer
    %s13 = sadd.s32 1, %s9
  $region7: #{outconv_forward.1} parent=0 // loop_footer_branch
    %8 = sbr.rel target = $region3
  $region8: #{outconv_forward.1} parent=0 // loop_exit
    _

</llo_original>
